<compile_context>
chip_gen: v5e
topology: v5e:2x2
jax: 0.10.0
libtpu: 0.0.40
codegen_flags: <defaults>
</compile_context>

<pallas_src>
import functools

import jax
import jax.numpy as jnp
from jax.experimental import pallas as pl
from jax.experimental.pallas import tpu as pltpu

BN_EPS = 1e-5
LANE = 128


def _round_up(n, m):
    return ((n + m - 1) // m) * m


# ----------------------------- Pallas kernel ------------------------------- #

def _make_fused_mlp_kernel(n_hidden, batch):
    """Builds a fused kernel for `n_hidden` (Linear+BN+ReLU) layers + final Linear.

    Ref layout (all VMEM, whole-array blocks):
      refs[0]                          : x            (B, Fin0)
      refs[1 + 4*i .. 4 + 4*i]         : w, b, gamma, beta for hidden layer i
      refs[1 + 4*n_hidden], [+1]       : w_out, b_out
      refs[-1]                         : output       (B, Fout_pad)
    """
    inv_b = 1.0 / float(batch)

    def kernel(*refs):
        x_ref = refs[0]
        o_ref = refs[-1]
        h = x_ref[...]                                   # (B, Fin)
        idx = 1
        for _ in range(n_hidden):
            w = refs[idx][...]                           # (Fin_pad, Fout_pad)
            b = refs[idx + 1][...]                       # (1, Fout_pad)
            gamma = refs[idx + 2][...]
            beta = refs[idx + 3][...]
            idx += 4
            # Linear (MXU)
            y = jnp.dot(h, w, preferred_element_type=jnp.float32) + b
            # One-pass BN statistics over the batch axis (biased variance).
            mean = jnp.sum(y, axis=0, keepdims=True) * inv_b
            ex2 = jnp.sum(y * y, axis=0, keepdims=True) * inv_b
            var = jnp.maximum(ex2 - mean * mean, 0.0)
            # Hoisted affine: z = y * scale + shift  (rsqrt -> EUP slot).
            scale = gamma * jax.lax.rsqrt(var + BN_EPS)
            shift = beta - mean * scale
            # Dropout is identity (inference); then ReLU.
            h = jnp.maximum(y * scale + shift, 0.0)
        w_out = refs[idx][...]
        b_out = refs[idx + 1][...]
        o_ref[...] = jnp.dot(h, w_out, preferred_element_type=jnp.float32) + b_out

    return kernel


_VMEM_SPEC = pl.BlockSpec(memory_space=pltpu.MemorySpace.VMEM)


# ------------------------------ JAX wrapper -------------------------------- #

@functools.partial(jax.jit, static_argnames=("out_features",))
def model_forward(x, padded_params, out_features):
    """Single fused pallas_call over the whole MLP. Returns (B, out_features)."""
    n_hidden = len(padded_params) - 1
    B = x.shape[0]

    flat_inputs = [x]
    for p in padded_params[:-1]:
        flat_inputs += [p["w"], p["b"], p["gamma"], p["beta"]]
    last = padded_params[-1]
    flat_inputs += [last["w"], last["b"]]
    fout_pad = last["w"].shape[1]

    kernel = _make_fused_mlp_kernel(n_hidden, B)
    out_padded = pl.pallas_call(
        kernel,
        out_shape=jax.ShapeDtypeStruct((B, fout_pad), jnp.float32),
        in_specs=[_VMEM_SPEC] * len(flat_inputs),
        out_specs=_VMEM_SPEC,
    )(*flat_inputs)
    return out_padded[:, :out_features]


# -------------------------- init & lane padding ---------------------------- #

def init_params(layers, key):
    """Mimics nn.Linear default init (uniform +-1/sqrt(fan_in)); BN gamma=1, beta=0."""
    params = []
    sizes = list(zip(layers[:-1], layers[1:]))
    n_layers = len(sizes)
    for i, (fin, fout) in enumerate(sizes):
        key, kw, kb = jax.random.split(key, 3)
        bound = 1.0 / jnp.sqrt(jnp.float32(fin))
        w = jax.random.uniform(kw, (fin, fout), jnp.float32, -bound, bound)
        b = jax.random.uniform(kb, (1, fout), jnp.float32, -bound, bound)
        p = {"w": w, "b": b}
        if i < n_layers - 1:  # hidden layers get BatchNorm params
            p["gamma"] = jnp.ones((1, fout), jnp.float32)
            p["beta"] = jnp.zeros((1, fout), jnp.float32)
        params.append(p)
    return params


def pad_params(params, lane=LANE):
    """Zero-pad every output-feature dim (and matching next-layer input dim) to a
    multiple of 128 lanes.  Done once, outside the forward pass.  Padded columns
    produce exactly-zero activations through BN/ReLU, so results are unchanged."""
    padded = []
    prev_out_pad = None
    for i, p in enumerate(params):
        fin, fout = p["w"].shape
        fin_pad = fin if i == 0 else prev_out_pad
        fout_pad = _round_up(fout, lane)
        w = jnp.zeros((fin_pad, fout_pad), jnp.float32).at[:fin, :fout].set(p["w"])
        b = jnp.zeros((1, fout_pad), jnp.float32).at[:, :fout].set(p["b"])
        q = {"w": w, "b": b}
        if "gamma" in p:
            q["gamma"] = jnp.zeros((1, fout_pad), jnp.float32).at[:, :fout].set(p["gamma"])
            q["beta"] = jnp.zeros((1, fout_pad), jnp.float32).at[:, :fout].set(p["beta"])
        padded.append(q)
        prev_out_pad = fout_pad
    return padded


# ----------------------------- pure-JAX reference --------------------------- #

def reference_forward(x, params):
    """Unpadded reference with identical semantics (batch-stat BN, biased var)."""
    h = x
    for p in params[:-1]:
        y = h @ p["w"] + p["b"]
        mean = jnp.mean(y, axis=0, keepdims=True)
        var = jnp.mean((y - mean) ** 2, axis=0, keepdims=True)
        z = p["gamma"] * (y - mean) * jax.lax.rsqrt(var + BN_EPS) + p["beta"]
        h = jnp.maximum(z, 0.0)
    last = params[-1]
    return h @ last["w"] + last["b"]


# --------------------------------- main ------------------------------------ #

if __name__ == "__main__":
    layers = [32, 64, 48, 16]   # MLP: 32 -> 64 -> 48 -> 16 (two hidden + output)
    batch = 8

    key = jax.random.PRNGKey(0)
    key, kx = jax.random.split(key)
    x = jax.random.normal(kx, (batch, layers[0]), jnp.float32)

    params = init_params(layers, key)
    padded_params = pad_params(params)

    out = model_forward(x, padded_params, out_features=layers[-1])
    jax.block_until_ready(out)

    assert out.shape == (batch, layers[-1]), out.shape
    assert bool(jnp.all(jnp.isfinite(out)))

    ref = reference_forward(x, params)
    assert jnp.allclose(out, ref, rtol=1e-3, atol=1e-3), float(jnp.max(jnp.abs(out - ref)))

    print("KERNEL_OK")
</pallas_src>

<mosaic_0001>
module attributes {stable_mosaic.version = 11 : i64} {
  func.func @kernel(%arg0: memref<8x32xf32, #tpu.memory_space<vmem>>, %arg1: memref<32x128xf32, #tpu.memory_space<vmem>>, %arg2: memref<1x128xf32, #tpu.memory_space<vmem>>, %arg3: memref<1x128xf32, #tpu.memory_space<vmem>>, %arg4: memref<1x128xf32, #tpu.memory_space<vmem>>, %arg5: memref<128x128xf32, #tpu.memory_space<vmem>>, %arg6: memref<1x128xf32, #tpu.memory_space<vmem>>, %arg7: memref<1x128xf32, #tpu.memory_space<vmem>>, %arg8: memref<1x128xf32, #tpu.memory_space<vmem>>, %arg9: memref<128x128xf32, #tpu.memory_space<vmem>>, %arg10: memref<1x128xf32, #tpu.memory_space<vmem>>, %arg11: memref<8x128xf32, #tpu.memory_space<vmem>>) attributes {dimension_semantics = [], scalar_prefetch = 0 : i64, scratch_operands = 0 : i64, tpu.core_type = #tpu.core_type<tc>} {
    %c0 = arith.constant 0 : index
    %c0_0 = arith.constant 0 : index
    %0 = vector.load %arg0[%c0, %c0_0] : memref<8x32xf32, #tpu.memory_space<vmem>>, vector<8x32xf32>
    %c0_1 = arith.constant 0 : index
    %c0_2 = arith.constant 0 : index
    %1 = vector.load %arg1[%c0_1, %c0_2] : memref<32x128xf32, #tpu.memory_space<vmem>>, vector<32x128xf32>
    %c0_3 = arith.constant 0 : index
    %c0_4 = arith.constant 0 : index
    %2 = vector.load %arg2[%c0_3, %c0_4] : memref<1x128xf32, #tpu.memory_space<vmem>>, vector<1x128xf32>
    %c0_5 = arith.constant 0 : index
    %c0_6 = arith.constant 0 : index
    %3 = vector.load %arg3[%c0_5, %c0_6] : memref<1x128xf32, #tpu.memory_space<vmem>>, vector<1x128xf32>
    %c0_7 = arith.constant 0 : index
    %c0_8 = arith.constant 0 : index
    %4 = vector.load %arg4[%c0_7, %c0_8] : memref<1x128xf32, #tpu.memory_space<vmem>>, vector<1x128xf32>
    %cst = arith.constant dense<0.000000e+00> : vector<8x128xf32>
    %5 = tpu.matmul %0, %1, %cst {dimension_numbers = #tpu.dot_dimension_numbers<[1], [0], [0], [1], [0, 0, 1, 1], [], []>} : vector<8x32xf32>, vector<32x128xf32>, vector<8x128xf32> -> vector<8x128xf32>
    %6 = vector.broadcast %2 : vector<1x128xf32> to vector<8x128xf32>
    %7 = arith.addf %5, %6 : vector<8x128xf32>
    %cst_9 = arith.constant dense<0.000000e+00> : vector<128xf32>
    %8 = vector.multi_reduction <add>, %7, %cst_9 [0] : vector<8x128xf32> to vector<128xf32>
    %9 = vector.shape_cast %8 : vector<128xf32> to vector<1x128xf32>
    %cst_10 = arith.constant 1.250000e-01 : f32
    %10 = vector.broadcast %cst_10 : f32 to vector<1x128xf32>
    %11 = arith.mulf %9, %10 : vector<1x128xf32>
    %12 = arith.mulf %7, %7 : vector<8x128xf32>
    %cst_11 = arith.constant dense<0.000000e+00> : vector<128xf32>
    %13 = vector.multi_reduction <add>, %12, %cst_11 [0] : vector<8x128xf32> to vector<128xf32>
    %14 = vector.shape_cast %13 : vector<128xf32> to vector<1x128xf32>
    %cst_12 = arith.constant 1.250000e-01 : f32
    %15 = vector.broadcast %cst_12 : f32 to vector<1x128xf32>
    %16 = arith.mulf %14, %15 : vector<1x128xf32>
    %17 = arith.mulf %11, %11 : vector<1x128xf32>
    %18 = arith.subf %16, %17 : vector<1x128xf32>
    %cst_13 = arith.constant 0.000000e+00 : f32
    %19 = vector.broadcast %cst_13 : f32 to vector<1x128xf32>
    %20 = arith.maximumf %18, %19 : vector<1x128xf32>
    %cst_14 = arith.constant 9.99999974E-6 : f32
    %21 = vector.broadcast %cst_14 : f32 to vector<1x128xf32>
    %22 = arith.addf %20, %21 : vector<1x128xf32>
    %23 = math.rsqrt %22 : vector<1x128xf32>
    %24 = arith.mulf %3, %23 : vector<1x128xf32>
    %25 = arith.mulf %11, %24 : vector<1x128xf32>
    %26 = arith.subf %4, %25 : vector<1x128xf32>
    %27 = vector.broadcast %24 : vector<1x128xf32> to vector<8x128xf32>
    %28 = arith.mulf %7, %27 : vector<8x128xf32>
    %29 = vector.broadcast %26 : vector<1x128xf32> to vector<8x128xf32>
    %30 = arith.addf %28, %29 : vector<8x128xf32>
    %cst_15 = arith.constant 0.000000e+00 : f32
    %31 = vector.broadcast %cst_15 : f32 to vector<8x128xf32>
    %32 = arith.maximumf %30, %31 : vector<8x128xf32>
    %c0_16 = arith.constant 0 : index
    %c0_17 = arith.constant 0 : index
    %33 = vector.load %arg5[%c0_16, %c0_17] : memref<128x128xf32, #tpu.memory_space<vmem>>, vector<128x128xf32>
    %c0_18 = arith.constant 0 : index
    %c0_19 = arith.constant 0 : index
    %34 = vector.load %arg6[%c0_18, %c0_19] : memref<1x128xf32, #tpu.memory_space<vmem>>, vector<1x128xf32>
    %c0_20 = arith.constant 0 : index
    %c0_21 = arith.constant 0 : index
    %35 = vector.load %arg7[%c0_20, %c0_21] : memref<1x128xf32, #tpu.memory_space<vmem>>, vector<1x128xf32>
    %c0_22 = arith.constant 0 : index
    %c0_23 = arith.constant 0 : index
    %36 = vector.load %arg8[%c0_22, %c0_23] : memref<1x128xf32, #tpu.memory_space<vmem>>, vector<1x128xf32>
    %cst_24 = arith.constant dense<0.000000e+00> : vector<8x128xf32>
    %37 = tpu.matmul %32, %33, %cst_24 {dimension_numbers = #tpu.dot_dimension_numbers<[1], [0], [0], [1], [0, 0, 1, 1], [], []>} : vector<8x128xf32>, vector<128x128xf32>, vector<8x128xf32> -> vector<8x128xf32>
    %38 = vector.broadcast %34 : vector<1x128xf32> to vector<8x128xf32>
    %39 = arith.addf %37, %38 : vector<8x128xf32>
    %cst_25 = arith.constant dense<0.000000e+00> : vector<128xf32>
    %40 = vector.multi_reduction <add>, %39, %cst_25 [0] : vector<8x128xf32> to vector<128xf32>
    %41 = vector.shape_cast %40 : vector<128xf32> to vector<1x128xf32>
    %cst_26 = arith.constant 1.250000e-01 : f32
    %42 = vector.broadcast %cst_26 : f32 to vector<1x128xf32>
    %43 = arith.mulf %41, %42 : vector<1x128xf32>
    %44 = arith.mulf %39, %39 : vector<8x128xf32>
    %cst_27 = arith.constant dense<0.000000e+00> : vector<128xf32>
    %45 = vector.multi_reduction <add>, %44, %cst_27 [0] : vector<8x128xf32> to vector<128xf32>
    %46 = vector.shape_cast %45 : vector<128xf32> to vector<1x128xf32>
    %cst_28 = arith.constant 1.250000e-01 : f32
    %47 = vector.broadcast %cst_28 : f32 to vector<1x128xf32>
    %48 = arith.mulf %46, %47 : vector<1x128xf32>
    %49 = arith.mulf %43, %43 : vector<1x128xf32>
    %50 = arith.subf %48, %49 : vector<1x128xf32>
    %cst_29 = arith.constant 0.000000e+00 : f32
    %51 = vector.broadcast %cst_29 : f32 to vector<1x128xf32>
    %52 = arith.maximumf %50, %51 : vector<1x128xf32>
    %cst_30 = arith.constant 9.99999974E-6 : f32
    %53 = vector.broadcast %cst_30 : f32 to vector<1x128xf32>
    %54 = arith.addf %52, %53 : vector<1x128xf32>
    %55 = math.rsqrt %54 : vector<1x128xf32>
    %56 = arith.mulf %35, %55 : vector<1x128xf32>
    %57 = arith.mulf %43, %56 : vector<1x128xf32>
    %58 = arith.subf %36, %57 : vector<1x128xf32>
    %59 = vector.broadcast %56 : vector<1x128xf32> to vector<8x128xf32>
    %60 = arith.mulf %39, %59 : vector<8x128xf32>
    %61 = vector.broadcast %58 : vector<1x128xf32> to vector<8x128xf32>
    %62 = arith.addf %60, %61 : vector<8x128xf32>
    %cst_31 = arith.constant 0.000000e+00 : f32
    %63 = vector.broadcast %cst_31 : f32 to vector<8x128xf32>
    %64 = arith.maximumf %62, %63 : vector<8x128xf32>
    %c0_32 = arith.constant 0 : index
    %c0_33 = arith.constant 0 : index
    %65 = vector.load %arg9[%c0_32, %c0_33] : memref<128x128xf32, #tpu.memory_space<vmem>>, vector<128x128xf32>
    %c0_34 = arith.constant 0 : index
    %c0_35 = arith.constant 0 : index
    %66 = vector.load %arg10[%c0_34, %c0_35] : memref<1x128xf32, #tpu.memory_space<vmem>>, vector<1x128xf32>
    %cst_36 = arith.constant dense<0.000000e+00> : vector<8x128xf32>
    %67 = tpu.matmul %64, %65, %cst_36 {dimension_numbers = #tpu.dot_dimension_numbers<[1], [0], [0], [1], [0, 0, 1, 1], [], []>} : vector<8x128xf32>, vector<128x128xf32>, vector<8x128xf32> -> vector<8x128xf32>
    %68 = vector.broadcast %66 : vector<1x128xf32> to vector<8x128xf32>
    %69 = arith.addf %67, %68 : vector<8x128xf32>
    %c0_37 = arith.constant 0 : index
    %c0_38 = arith.constant 0 : index
    %70 = vector.load %arg11[%c0_37, %c0_38] : memref<8x128xf32, #tpu.memory_space<vmem>>, vector<8x128xf32>
    tpu.vector_store %arg11[%c0_37, %c0_38], %69 {strides = array<i32>} : memref<8x128xf32, #tpu.memory_space<vmem>>, vector<8x128xf32>,
    return
  }
}

</mosaic_0001>

<llo_original>
// kernel: model_forward.1
$region0: #{model_forward.1}
  #allocation0 [shape = 'u32[]', space=smem, size = 0x4, offset = 0x4, fixed_abs, tag = 'smem constant byte address 0x4 - core index']
  #allocation1 [shape = 'u32[72,128]{1,0:T(1,128)}', space=vmem, size = 0x9000, scoped, tag = 'internal scratch']
  %s0 = inlined_call_operand.hbm [shape: f32[8,32], index: 0, kind: input, shape index: {}]
  %s1 = inlined_call_operand.hbm [shape: f32[32,128], index: 1, kind: input, shape index: {}]
  %s2 = inlined_call_operand.hbm [shape: f32[1,128], index: 2, kind: input, shape index: {}]
  %s3 = inlined_call_operand.vmem [shape: f32[1,128], index: 3, kind: input, shape index: {}]
  %s4 = inlined_call_operand.hbm [shape: f32[1,128], index: 4, kind: input, shape index: {}]
  %s5 = inlined_call_operand.hbm [shape: f32[128,128], index: 5, kind: input, shape index: {}]
  %s6 = inlined_call_operand.vmem [shape: f32[1,128], index: 6, kind: input, shape index: {}]
  %s7 = inlined_call_operand.vmem [shape: f32[1,128], index: 7, kind: input, shape index: {}]
  %s8 = inlined_call_operand.vmem [shape: f32[1,128], index: 8, kind: input, shape index: {}]
  %s9 = inlined_call_operand.hbm [shape: f32[128,128], index: 9, kind: input, shape index: {}]
  %s10 = inlined_call_operand.vmem [shape: f32[1,128], index: 10, kind: input, shape index: {}]
  %s11 = inlined_call_operand.hbm [shape: f32[8,128], index: 11, kind: output, shape index: {}]
  %s12 = sld [smem:[#allocation0]]
  $region78: #{model_forward.1} parent=0
    _
  %s14 = ssub.s32 1, %s12
  %s15 = scalar_select 0, %s14, %s12
  $region1: #{model_forward.1} parent=0
    #allocation2 [shape = 'u8[4096]{0}', space=vmem, size = 0x1000, scoped, tag = 'input window, operand 0, single buffered']
    #allocation3 [shape = 's32[1]{0}', space=sflag, size = 0x4, scoped, tag = 'scoped memory for model_forward.1']
    #allocation4 [shape = 's32[1]{0}', space=sflag, size = 0x4, scoped, tag = 'scoped memory for model_forward.1']
    #allocation5 [shape = 'u8[16384]{0}', space=vmem, size = 0x4000, scoped, tag = 'input window, operand 1, single buffered']
    #allocation6 [shape = 's32[1]{0}', space=sflag, size = 0x4, scoped, tag = 'scoped memory for model_forward.1']
    #allocation7 [shape = 'u8[512]{0}', space=vmem, size = 0x400, scoped, tag = 'input window, operand 2, single buffered']
    #allocation8 [shape = 'u8[512]{0}', space=vmem, size = 0x400, scoped, tag = 'input window, operand 4, single buffered']
    #allocation9 [shape = 's32[1]{0}', space=sflag, size = 0x4, scoped, tag = 'scoped memory for model_forward.1']
    #allocation10 [shape = 'u8[65536]{0}', space=vmem, size = 0x10000, scoped, tag = 'input window, operand 5, single buffered']
    #allocation11 [shape = 'u8[65536]{0}', space=vmem, size = 0x10000, scoped, tag = 'input window, operand 9, single buffered']
    #allocation12 [shape = 's32[1]{0}', space=sflag, size = 0x4, scoped, tag = 'scoped memory for model_forward.1']
    #allocation13 [shape = 'u8[4096]{0}', space=vmem, size = 0x1000, scoped, tag = 'output window, operand 0, single buffered']
    %16 = vsyncpa [#allocation3], 0
    %17 = vsyncpa [#allocation6], 0
    %18 = vsyncpa [#allocation9], 0
    %19 = vsyncpa [#allocation12], 0
    %20 = vsyncpa [#allocation4], 0
    // Predicated region
    $region2: #{model_forward.1} parent=1 // pred_check
      _
    $region3: #{model_forward.1} parent=1 // pred_check_branch
      %22 = sbr.rel (0) target = $region5
    $region4: #{model_forward.1} parent=1 // pred_region
      %24 = vsyncadd [#allocation3], 0
      %s26 = sshll.u32 %s0, 4
      %s27 = int_to_ptr.hbm [resolvable:$true] %s26
      %s28 = sshll.u32 [#allocation2], 4
      %s29 = int_to_ptr.vmem [resolvable:$true] %s28
      %31 = dma.hbm_to_vmem [thread:$0]  %s27, 128, %s29, [#allocation3]
    $region5: #{model_forward.1} parent=1 // pred_fallthru
      _
    // Predicated region
    $region6: #{model_forward.1} parent=1 // pred_check
      _
    $region7: #{model_forward.1} parent=1 // pred_check_branch
      %33 = sbr.rel (0) target = $region9
    $region8: #{model_forward.1} parent=1 // pred_region
      %35 = vsyncadd [#allocation6], 0
      %s36 = sshll.u32 %s1, 4
      %s37 = int_to_ptr.hbm [resolvable:$true] %s36
      %s38 = sshll.u32 [#allocation5], 4
      %s39 = int_to_ptr.vmem [resolvable:$true] %s38
      %44 = dma.hbm_to_vmem [thread:$0]  %s37, 512, %s39, [#allocation6], 128, 128, 8
    $region9: #{model_forward.1} parent=1 // pred_fallthru
      _
    // Predicated region
    $region10: #{model_forward.1} parent=1 // pred_check
      _
    $region11: #{model_forward.1} parent=1 // pred_check_branch
      %46 = sbr.rel (0) target = $region13
    $region12: #{model_forward.1} parent=1 // pred_region
      %48 = vsyncadd [#allocation6], 0
      %s50 = sshll.u32 %s2, 4
      %s51 = int_to_ptr.hbm [resolvable:$true] %s50
      %s52 = sshll.u32 [#allocation7], 4
      %s53 = int_to_ptr.vmem [resolvable:$true] %s52
      %55 = dma.hbm_to_vmem [thread:$0]  %s51, 16, %s53, [#allocation6]
    $region13: #{model_forward.1} parent=1 // pred_fallthru
      _
    // Predicated region
    $region14: #{model_forward.1} parent=1 // pred_check
      _
    $region15: #{model_forward.1} parent=1 // pred_check_branch
      %57 = sbr.rel (0) target = $region17
    $region16: #{model_forward.1} parent=1 // pred_region
      _
    $region17: #{model_forward.1} parent=1 // pred_fallthru
      _
    // Predicated region
    $region18: #{model_forward.1} parent=1 // pred_check
      _
    $region19: #{model_forward.1} parent=1 // pred_check_branch
      %59 = sbr.rel (0) target = $region21
    $region20: #{model_forward.1} parent=1 // pred_region
      %61 = vsyncadd [#allocation9], 0
      %s63 = sshll.u32 %s4, 4
      %s64 = int_to_ptr.hbm [resolvable:$true] %s63
      %s65 = sshll.u32 [#allocation8], 4
      %s66 = int_to_ptr.vmem [resolvable:$true] %s65
      %68 = dma.hbm_to_vmem [thread:$0]  %s64, 16, %s66, [#allocation9]
    $region21: #{model_forward.1} parent=1 // pred_fallthru
      _
    // Predicated region
    $region22: #{model_forward.1} parent=1 // pred_check
      _
    $region23: #{model_forward.1} parent=1 // pred_check_branch
      %70 = sbr.rel (0) target = $region25
    $region24: #{model_forward.1} parent=1 // pred_region
      %72 = vsyncadd [#allocation9], 0
      %s73 = sshll.u32 %s5, 4
      %s74 = int_to_ptr.hbm [resolvable:$true] %s73
      %s75 = sshll.u32 [#allocation10], 4
      %s76 = int_to_ptr.vmem [resolvable:$true] %s75
      %81 = dma.hbm_to_vmem [thread:$0]  %s74, 2048, %s76, [#allocation9], 128, 128, 8
    $region25: #{model_forward.1} parent=1 // pred_fallthru
      _
    // Predicated region
    $region26: #{model_forward.1} parent=1 // pred_check
      _
    $region27: #{model_forward.1} parent=1 // pred_check_branch
      %83 = sbr.rel (0) target = $region29
    $region28: #{model_forward.1} parent=1 // pred_region
      _
    $region29: #{model_forward.1} parent=1 // pred_fallthru
      _
    // Predicated region
    $region30: #{model_forward.1} parent=1 // pred_check
      _
    $region31: #{model_forward.1} parent=1 // pred_check_branch
      %85 = sbr.rel (0) target = $region33
    $region32: #{model_forward.1} parent=1 // pred_region
      _
    $region33: #{model_forward.1} parent=1 // pred_fallthru
      _
    // Predicated region
    $region34: #{model_forward.1} parent=1 // pred_check
      _
    $region35: #{model_forward.1} parent=1 // pred_check_branch
      %87 = sbr.rel (0) target = $region37
    $region36: #{model_forward.1} parent=1 // pred_region
      _
    $region37: #{model_forward.1} parent=1 // pred_fallthru
      _
    // Predicated region
    $region38: #{model_forward.1} parent=1 // pred_check
      _
    $region39: #{model_forward.1} parent=1 // pred_check_branch
      %89 = sbr.rel (0) target = $region41
    $region40: #{model_forward.1} parent=1 // pred_region
      %91 = vsyncadd [#allocation12], 0
      %s92 = sshll.u32 %s9, 4
      %s93 = int_to_ptr.hbm [resolvable:$true] %s92
      %s94 = sshll.u32 [#allocation11], 4
      %s95 = int_to_ptr.vmem [resolvable:$true] %s94
      %100 = dma.hbm_to_vmem [thread:$0]  %s93, 2048, %s95, [#allocation12], 128, 128, 8
    $region41: #{model_forward.1} parent=1 // pred_fallthru
      _
    // Predicated region
    $region42: #{model_forward.1} parent=1 // pred_check
      _
    $region43: #{model_forward.1} parent=1 // pred_check_branch
      %102 = sbr.rel (0) target = $region45
    $region44: #{model_forward.1} parent=1 // pred_region
      _
    $region45: #{model_forward.1} parent=1 // pred_fallthru
      _
    // Predicated region
    $region46: #{model_forward.1} parent=1 // pred_check
      _
    $region47: #{model_forward.1} parent=1 // pred_check_branch
      %104 = sbr.rel (0) target = $region49
    $region48: #{model_forward.1} parent=1 // pred_region
      %106 = dma.done [#allocation3], 128
    $region49: #{model_forward.1} parent=1 // pred_fallthru
      _
    // Predicated region
    $region50: #{model_forward.1} parent=1 // pred_check
      _
    $region51: #{model_forward.1} parent=1 // pred_check_branch
      %108 = sbr.rel (0) target = $region53
    $region52: #{model_forward.1} parent=1 // pred_region
      %110 = dma.done [#allocation6], 512
    $region53: #{model_forward.1} parent=1 // pred_fallthru
      _
    // Predicated region
    $region54: #{model_forward.1} parent=1 // pred_check
      _
    $region55: #{model_forward.1} parent=1 // pred_check_branch
      %112 = sbr.rel (0) target = $region57
    $region56: #{model_forward.1} parent=1 // pred_region
      %114 = dma.done [#allocation6], 16
    $region57: #{model_forward.1} parent=1 // pred_fallthru
      _
    // Predicated region
    $region58: #{model_forward.1} parent=1 // pred_check
      _
    $region59: #{model_forward.1} parent=1 // pred_check_branch
      %116 = sbr.rel (0) target = $region61
    $region60: #{model_forward.1} parent=1 // pred_region
      %118 = dma.done [#allocation9], 16
    $region61: #{model_forward.1} parent=1 // pred_fallthru
      _
    // Predicated region
    $region62: #{model_forward.1} parent=1 // pred_check
      _
    $region63: #{model_forward.1} parent=1 // pred_check_branch
      %120 = sbr.rel (0) target = $region65
    $region64: #{model_forward.1} parent=1 // pred_region
      %122 = dma.done [#allocation9], 2048
    $region65: #{model_forward.1} parent=1 // pred_fallthru
      _
    // Predicated region
    $region66: #{model_forward.1} parent=1 // pred_check
      _
    $region67: #{model_forward.1} parent=1 // pred_check_branch
      %124 = sbr.rel (0) target = $region69
    $region68: #{model_forward.1} parent=1 // pred_region
      %126 = dma.done [#allocation12], 2048
    $region69: #{model_forward.1} parent=1 // pred_fallthru
      _
    %v127 = vld [vmem:[#allocation2] sm:$0xff]
    %v128 = vld [vmem:[#allocation5] sm:$0xff]
    %v129 = vld [vmem:[#allocation5 + $0x8] sm:$0xff]
    %v130 = vld [vmem:[#allocation5 + $0x10] sm:$0xff]
    %v131 = vld [vmem:[#allocation5 + $0x18] sm:$0xff]
    %v132 = vld [vmem:[#allocation7] sm:$0x1]
    %v133 = vld [vmem:[%s3] sm:$0x1]
    %v134 = vld [vmem:[#allocation8] sm:$0x1]
    %v136 = vperm.slane %v132, 0
    %vm138 = vcmask 261120
    %v140 = vsel %vm138, %v127, 0
    %142 = vmatpush.msra.mxu0 0.0
    %143 = vmatpush.msra.mxu0 0.0
    %144 = vmatpush.msra.mxu0 0.0
    %145 = vmatpush.msra.mxu0 0.0
    %146 = vmatpush.msra.mxu0 0.0
    %147 = vmatpush.msra.mxu0 0.0
    %148 = vmatpush.msra.mxu0 0.0
    %149 = vmatpush.msra.mxu0 0.0
    %150 = vmatpush.msra.mxu0 0.0
    %151 = vmatpush.msra.mxu0 0.0
    %152 = vmatpush.msra.mxu0 0.0
    %153 = vmatpush.msra.mxu0 0.0
    %154 = vmatpush.msra.mxu0 %v131
    %155 = vmatpush.msra.mxu0 %v130
    %156 = vmatpush.msra.mxu0 %v129
    %157 = vmatpush.msra.mxu0 %v128
    %158 = vmatmul.f32.gmra.mxu0 %v140
    %v159 = vpop.f32.mrf.mxu0
    %v160 = vadd.f32 %v136, %v159
    %161 = vdwg.mxu0
    %v162 = vrot.slane %v160, 4
    %v163 = vadd.f32 %v160, %v162
    %v164 = vrot.slane %v163, 2
    %v165 = vadd.f32 %v163, %v164
    %v166 = vrot.slane %v165, 1
    %v167 = vadd.f32 %v165, %v166
    %v168 = vmul.f32 %v167, 0.125
    %v169 = vmul.f32 %v160, %v160
    %v170 = vrot.slane %v169, 4
    %v171 = vadd.f32 %v169, %v170
    %v172 = vrot.slane %v171, 2
    %v173 = vadd.f32 %v171, %v172
    %v174 = vrot.slane %v173, 1
    %v175 = vadd.f32 %v173, %v174
    %v176 = vmul.f32 %v175, 0.125
    %v177 = vmul.f32 %v168, %v168
    %v178 = vsub.f32 %v176, %v177
    %v179 = vmax.f32 %v178, 0.0
    %v180 = vadd.f32 %v179, 1e-05
    %v181 = vrsqrt.pop %v180
    %v182 = vmul.f32 %v181, %v180
    %v183 = vmul.f32 %v182, %v181
    %v184 = vmul.f32 0.5, %v183
    %v185 = vsub.f32 1.5, %v184
    %v186 = vmul.f32 %v181, %v185
    %vm187 = vweird.f32 %v180
    %vm188 = vweird.f32 %v181
    %vm189 = vmor %vm187, %vm188
    %v190 = vsel %vm189, %v181, %v186
    %v191 = vmul.f32 %v133, %v190
    %v192 = vmul.f32 %v168, %v191
    %v193 = vsub.f32 %v134, %v192
    %v195 = vperm.slane %v191, 0
    %v197 = vmul.f32 %v160, %v195
    %v199 = vperm.slane %v193, 0
    %v201 = vadd.f32 %v197, %v199
    %v202 = vmax.f32 %v201, 0.0
    %v203 = vld [vmem:[#allocation10] sm:$0xff]
    %v204 = vld [vmem:[#allocation10 + $0x8] sm:$0xff]
    %v205 = vld [vmem:[#allocation10 + $0x10] sm:$0xff]
    %v206 = vld [vmem:[#allocation10 + $0x18] sm:$0xff]
    %v207 = vld [vmem:[#allocation10 + $0x20] sm:$0xff]
    %v208 = vld [vmem:[#allocation10 + $0x28] sm:$0xff]
    %v209 = vld [vmem:[#allocation10 + $0x30] sm:$0xff]
    %v210 = vld [vmem:[#allocation10 + $0x38] sm:$0xff]
    %v211 = vld [vmem:[#allocation10 + $0x40] sm:$0xff]
    %v212 = vld [vmem:[#allocation10 + $0x48] sm:$0xff]
    %v213 = vld [vmem:[#allocation10 + $0x50] sm:$0xff]
    %v214 = vld [vmem:[#allocation10 + $0x58] sm:$0xff]
    %v215 = vld [vmem:[#allocation10 + $0x60] sm:$0xff]
    %v216 = vld [vmem:[#allocation10 + $0x68] sm:$0xff]
    %v217 = vld [vmem:[#allocation10 + $0x70] sm:$0xff]
    %v218 = vld [vmem:[#allocation10 + $0x78] sm:$0xff]
    %v219 = vld [vmem:[%s6] sm:$0x1]
    %v220 = vld [vmem:[%s7] sm:$0x1]
    %v221 = vld [vmem:[%s8] sm:$0x1]
    %v223 = vperm.slane %v219, 0
    %225 = vmatpush.msra.mxu0 %v218
    %226 = vmatpush.msra.mxu0 %v217
    %227 = vmatpush.msra.mxu0 %v216
    %228 = vmatpush.msra.mxu0 %v215
    %229 = vmatpush.msra.mxu0 %v214
    %230 = vmatpush.msra.mxu0 %v213
    %231 = vmatpush.msra.mxu0 %v212
    %232 = vmatpush.msra.mxu0 %v211
    %233 = vmatpush.msra.mxu0 %v210
    %234 = vmatpush.msra.mxu0 %v209
    %235 = vmatpush.msra.mxu0 %v208
    %236 = vmatpush.msra.mxu0 %v207
    %237 = vmatpush.msra.mxu0 %v206
    %238 = vmatpush.msra.mxu0 %v205
    %239 = vmatpush.msra.mxu0 %v204
    %240 = vmatpush.msra.mxu0 %v203
    %241 = vmatmul.f32.gmra.mxu0 %v202
    %v242 = vpop.f32.mrf.mxu0
    %v243 = vadd.f32 %v223, %v242
    %244 = vdwg.mxu0
    %v245 = vrot.slane %v243, 4
    %v246 = vadd.f32 %v243, %v245
    %v247 = vrot.slane %v246, 2
    %v248 = vadd.f32 %v246, %v247
    %v249 = vrot.slane %v248, 1
    %v250 = vadd.f32 %v248, %v249
    %v251 = vmul.f32 %v250, 0.125
    %v252 = vmul.f32 %v243, %v243
    %v253 = vrot.slane %v252, 4
    %v254 = vadd.f32 %v252, %v253
    %v255 = vrot.slane %v254, 2
    %v256 = vadd.f32 %v254, %v255
    %v257 = vrot.slane %v256, 1
    %v258 = vadd.f32 %v256, %v257
    %v259 = vmul.f32 %v258, 0.125
    %v260 = vmul.f32 %v251, %v251
    %v261 = vsub.f32 %v259, %v260
    %v262 = vmax.f32 %v261, 0.0
    %v263 = vadd.f32 %v262, 1e-05
    %v264 = vrsqrt.pop %v263
    %v265 = vmul.f32 %v264, %v263
    %v266 = vmul.f32 %v265, %v264
    %v267 = vmul.f32 0.5, %v266
    %v268 = vsub.f32 1.5, %v267
    %v269 = vmul.f32 %v264, %v268
    %vm270 = vweird.f32 %v263
    %vm271 = vweird.f32 %v264
    %vm272 = vmor %vm270, %vm271
    %v273 = vsel %vm272, %v264, %v269
    %v274 = vmul.f32 %v220, %v273
    %v275 = vmul.f32 %v251, %v274
    %v276 = vsub.f32 %v221, %v275
    %v278 = vperm.slane %v274, 0
    %v280 = vmul.f32 %v243, %v278
    %v282 = vperm.slane %v276, 0
    %v284 = vadd.f32 %v280, %v282
    %v285 = vmax.f32 %v284, 0.0
    %v286 = vld [vmem:[#allocation11] sm:$0xff]
    %v287 = vld [vmem:[#allocation11 + $0x8] sm:$0xff]
    %v288 = vld [vmem:[#allocation11 + $0x10] sm:$0xff]
    %v289 = vld [vmem:[#allocation11 + $0x18] sm:$0xff]
    %v290 = vld [vmem:[#allocation11 + $0x20] sm:$0xff]
    %v291 = vld [vmem:[#allocation11 + $0x28] sm:$0xff]
    %v292 = vld [vmem:[#allocation11 + $0x30] sm:$0xff]
    %v293 = vld [vmem:[#allocation11 + $0x38] sm:$0xff]
    %v294 = vld [vmem:[#allocation11 + $0x40] sm:$0xff]
    %v295 = vld [vmem:[#allocation11 + $0x48] sm:$0xff]
    %v296 = vld [vmem:[#allocation11 + $0x50] sm:$0xff]
    %v297 = vld [vmem:[#allocation11 + $0x58] sm:$0xff]
    %v298 = vld [vmem:[#allocation11 + $0x60] sm:$0xff]
    %v299 = vld [vmem:[#allocation11 + $0x68] sm:$0xff]
    %v300 = vld [vmem:[#allocation11 + $0x70] sm:$0xff]
    %v301 = vld [vmem:[#allocation11 + $0x78] sm:$0xff]
    %v302 = vld [vmem:[%s10] sm:$0x1]
    %v304 = vperm.slane %v302, 0
    %306 = vmatpush.msra.mxu0 %v301
    %307 = vmatpush.msra.mxu0 %v300
    %308 = vmatpush.msra.mxu0 %v299
    %309 = vmatpush.msra.mxu0 %v298
    %310 = vmatpush.msra.mxu0 %v297
    %311 = vmatpush.msra.mxu0 %v296
    %312 = vmatpush.msra.mxu0 %v295
    %313 = vmatpush.msra.mxu0 %v294
    %314 = vmatpush.msra.mxu0 %v293
    %315 = vmatpush.msra.mxu0 %v292
    %316 = vmatpush.msra.mxu0 %v291
    %317 = vmatpush.msra.mxu0 %v290
    %318 = vmatpush.msra.mxu0 %v289
    %319 = vmatpush.msra.mxu0 %v288
    %320 = vmatpush.msra.mxu0 %v287
    %321 = vmatpush.msra.mxu0 %v286
    %322 = vmatmul.f32.gmra.mxu0 %v285
    %v323 = vpop.f32.mrf.mxu0
    %v324 = vadd.f32 %v304, %v323
    %325 = vdwg.mxu0
    %326 = vst [vmem:[#allocation13] sm:$0xff] %v324
    // Predicated region
    $region70: #{model_forward.1} parent=1 // pred_check
      _
    $region71: #{model_forward.1} parent=1 // pred_check_branch
      %328 = sbr.rel (0) target = $region73
    $region72: #{model_forward.1} parent=1 // pred_region
      %330 = vsyncadd [#allocation4], 0
      %s332 = sshll.u32 [#allocation13], 4
      %s333 = int_to_ptr.vmem [resolvable:$true] %s332
      %s334 = sshll.u32 %s11, 4
      %s335 = int_to_ptr.hbm [resolvable:$true] %s334
      %337 = dma.vmem_to_hbm [thread:$0]  %s333, 128, %s335, [#allocation4]
    $region73: #{model_forward.1} parent=1 // pred_fallthru
      _
    // Predicated region
    $region74: #{model_forward.1} parent=1 // pred_check
      _
    $region75: #{model_forward.1} parent=1 // pred_check_branch
      %339 = sbr.rel (0) target = $region77
    $region76: #{model_forward.1} parent=1 // pred_region
      %341 = dma.done [#allocation4], 128
    $region77: #{model_forward.1} parent=1 // pred_fallthru
      _
    %342 = vsyncpa [#allocation3], 1
    %343 = vsyncpa [#allocation6], 1
    %344 = vsyncpa [#allocation9], 1
    %345 = vsyncpa [#allocation12], 1
    %346 = vsyncpa [#allocation4], 1

</llo_original>
